<compile_context>
chip_gen: v6e
topology: v6e:2x2x1
jax: 0.10.0
libtpu: 0.0.40
codegen_flags: <defaults>
</compile_context>

<pallas_src>
import functools

import jax
import jax.numpy as jnp
from jax.experimental import pallas as pl
from jax.experimental.pallas import tpu as pltpu

SMOOTH_NR = 1e-5
SMOOTH_DR = 1e-5
LANE = 128


def _round_up(x, m):
    return -(-x // m) * m


def _gen_dice_kernel(pred_ref, targ_ref, out_ref, *accs, n_classes):
    # pred_ref: (1, C, S, 128)  float block (native dtype) for batch element b
    # targ_ref: (1, S, 128)     int8/int32 class-id block (-1 marks padding)
    # out_ref : (1, 1, 128)     float32, per-batch dice value splatted on lanes
    # accs    : 3*C VMEM (1, 1) float32 accumulators:
    #           [intersection_0..C-1][ground_o_0..C-1][pred_o_0..C-1]
    C = n_classes
    inter = accs[0:C]
    ground = accs[C:2 * C]
    predo = accs[2 * C:3 * C]

    k = pl.program_id(1)
    nk = pl.num_programs(1)

    @pl.when(k == 0)
    def _():
        for r in accs:
            r[...] = jnp.zeros_like(r)

    # ---- streaming spatial reduction (hot path) ----------------------------
    t = targ_ref[0].astype(jnp.int32)                      # (S, 128)
    for c in range(C):
        p_c = pred_ref[0, c].astype(jnp.float32)           # (S, 128), f32 accum
        mask = t == c
        inter[c][...] += jnp.sum(jnp.where(mask, p_c, 0.0))
        ground[c][...] += jnp.sum(jnp.where(mask, 1.0, 0.0))
        predo[c][...] += jnp.sum(p_c)

    # ---- finalize: class weighting + dice, once per batch element ----------
    @pl.when(k == nk - 1)
    def _():
        gs = [ground[c][...] for c in range(C)]            # (1, 1) each
        # w_c = 1 / ground_c^2; empty classes get the max finite weight (MONAI).
        ws = []
        for g in gs:
            empty = g == 0.0
            safe = jnp.where(empty, 1.0, g)
            ws.append(jnp.where(empty, 0.0, 1.0 / (safe * safe)))
        w_max = ws[0]
        for w in ws[1:]:
            w_max = jnp.maximum(w_max, w)
        numer = jnp.zeros((1, 1), jnp.float32)
        denom = jnp.zeros((1, 1), jnp.float32)
        for c in range(C):
            w = jnp.where(gs[c] == 0.0, w_max, ws[c])
            numer = numer + inter[c][...] * w
            denom = denom + (gs[c] + predo[c][...]) * w
        f = 1.0 - (2.0 * numer + SMOOTH_NR) / (denom + SMOOTH_DR)   # (1, 1)
        out_ref[...] = jnp.broadcast_to(f.reshape(1, 1, 1), (1, 1, LANE))


def gen_dice_loss(pred, target, n_classes, *, block_sublanes=None):
    """pred: (B, C, H, W) float scores; target: (B, H, W) integer class ids."""
    B, C, H, W = pred.shape
    assert C == n_classes
    HW = H * W

    tgt_dtype = jnp.int8 if n_classes <= 126 else jnp.int32
    pred_flat = pred.reshape(B, C, HW)                  # keep native dtype (bf16 ok)
    targ_flat = target.reshape(B, HW).astype(tgt_dtype)

    hw128 = _round_up(HW, LANE) // LANE

    # Pick a lane-dense spatial tile: multiple of 32 sublanes (aligns f32/bf16/int8
    # tiling), sized so the double-buffered input blocks stay well under the
    # per-generation VMEM budget (v7x has only 64 MiB total per TensorCore).
    if block_sublanes is not None:
        s_tile = hw128 if block_sublanes >= hw128 else max(32, _round_up(block_sublanes, 32))
    elif hw128 <= 32:
        s_tile = hw128                                   # full dim -> always legal
    else:
        row_bytes = C * LANE * pred.dtype.itemsize + LANE * jnp.dtype(tgt_dtype).itemsize
        budget = 6 * 1024 * 1024                         # per block; x2 for double buffering
        s_tile = max(32, (budget // row_bytes) // 32 * 32)
        s_tile = min(s_tile, 2048, _round_up(hw128, 32))

    hw128_pad = _round_up(hw128, s_tile)
    hw_total = hw128_pad * LANE
    pad = hw_total - HW
    if pad:
        pred_flat = jnp.pad(pred_flat, ((0, 0), (0, 0), (0, pad)))           # zeros
        targ_flat = jnp.pad(targ_flat, ((0, 0), (0, pad)), constant_values=-1)  # no class

    pred4 = pred_flat.reshape(B, C, hw128_pad, LANE)
    targ4 = targ_flat.reshape(B, hw128_pad, LANE)
    num_k = hw128_pad // s_tile

    kernel = functools.partial(_gen_dice_kernel, n_classes=n_classes)
    out = pl.pallas_call(
        kernel,
        out_shape=jax.ShapeDtypeStruct((B, 1, LANE), jnp.float32),
        grid_spec=pltpu.PrefetchScalarGridSpec(
            num_scalar_prefetch=0,
            grid=(B, num_k),                              # reduction axis last
            in_specs=[
                pl.BlockSpec((1, C, s_tile, LANE), lambda b, k: (b, 0, k, 0)),
                pl.BlockSpec((1, s_tile, LANE), lambda b, k: (b, k, 0)),
            ],
            out_specs=pl.BlockSpec((1, 1, LANE), lambda b, k: (b, 0, 0)),
            scratch_shapes=[pltpu.VMEM((1, 1), jnp.float32)
                            for _ in range(3 * n_classes)],
        ),
        compiler_params=pltpu.CompilerParams(
            dimension_semantics=("parallel", "arbitrary"),
            vmem_limit_bytes=48 * 1024 * 1024,
        ),
    )(pred4, targ4)
    return jnp.mean(out[:, 0, 0])                         # reduction="mean" over batch


def _reference(pred, target, n_classes):
    """Plain-JAX replica of GenDiceLoss (MONAI GeneralizedDiceLoss defaults)."""
    onehot = jax.nn.one_hot(target, n_classes, dtype=jnp.float32)
    onehot = jnp.transpose(onehot, (0, 3, 1, 2))          # (B, C, H, W)
    reduce_axis = (2, 3)
    inter = jnp.sum(onehot * pred, axis=reduce_axis)
    ground = jnp.sum(onehot, axis=reduce_axis)
    pred_o = jnp.sum(pred, axis=reduce_axis)
    denom = ground + pred_o
    w = 1.0 / (ground * ground)
    infs = jnp.isinf(w)
    w = jnp.where(infs, 0.0, w)
    w = w + infs.astype(jnp.float32) * jnp.max(w, axis=1, keepdims=True)
    numer = 2.0 * jnp.sum(inter * w, axis=1, keepdims=True) + SMOOTH_NR
    den = jnp.sum(denom * w, axis=1, keepdims=True) + SMOOTH_DR
    return jnp.mean(1.0 - numer / den)


if __name__ == "__main__":
    key = jax.random.PRNGKey(0)

    # Case 1: small canonical shape (B=2, C=4, 16x16) — single spatial tile.
    B, C, H, W = 2, 4, 16, 16
    kp, kt, key = jax.random.split(key, 3)
    pred = jax.nn.softmax(jax.random.normal(kp, (B, C, H, W), jnp.float32), axis=1)
    target = jax.random.randint(kt, (B, H, W), 0, C, dtype=jnp.int32)
    loss = jax.block_until_ready(gen_dice_loss(pred, target, n_classes=C))
    ref = jax.block_until_ready(_reference(pred, target, C))
    assert abs(float(loss) - float(ref)) < 3e-5, (float(loss), float(ref))

    # Case 2: non-multiple-of-128 spatial size with a forced small tile —
    # exercises padding, the multi-step streaming accumulation and int8 targets.
    B, C, H, W = 2, 4, 100, 100
    kp, kt = jax.random.split(key)
    pred = jax.nn.softmax(jax.random.normal(kp, (B, C, H, W), jnp.float32), axis=1)
    target = jax.random.randint(kt, (B, H, W), 0, C, dtype=jnp.int32)
    loss = jax.block_until_ready(
        gen_dice_loss(pred, target, n_classes=C, block_sublanes=32))
    ref = jax.block_until_ready(_reference(pred, target, C))
    assert abs(float(loss) - float(ref)) < 5e-5, (float(loss), float(ref))

    print("KERNEL_OK")
</pallas_src>

<mosaic_0001>
module attributes {stable_mosaic.version = 11 : i64} {
  func.func @_gen_dice_kernel(%arg0: i32, %arg1: i32, %arg2: memref<1x4x2x128xf32, #tpu.memory_space<vmem>>, %arg3: memref<1x2x128xi8, #tpu.memory_space<vmem>>, %arg4: memref<1x1x128xf32, #tpu.memory_space<vmem>>, %arg5: memref<1x1xf32, #tpu.memory_space<vmem>>, %arg6: memref<1x1xf32, #tpu.memory_space<vmem>>, %arg7: memref<1x1xf32, #tpu.memory_space<vmem>>, %arg8: memref<1x1xf32, #tpu.memory_space<vmem>>, %arg9: memref<1x1xf32, #tpu.memory_space<vmem>>, %arg10: memref<1x1xf32, #tpu.memory_space<vmem>>, %arg11: memref<1x1xf32, #tpu.memory_space<vmem>>, %arg12: memref<1x1xf32, #tpu.memory_space<vmem>>, %arg13: memref<1x1xf32, #tpu.memory_space<vmem>>, %arg14: memref<1x1xf32, #tpu.memory_space<vmem>>, %arg15: memref<1x1xf32, #tpu.memory_space<vmem>>, %arg16: memref<1x1xf32, #tpu.memory_space<vmem>>) attributes {dimension_semantics = [#tpu.dimension_semantics<parallel>, #tpu.dimension_semantics<arbitrary>], iteration_bounds = array<i64: 2, 1>, scalar_prefetch = 0 : i64, scratch_operands = 12 : i64, tpu.core_type = #tpu.core_type<tc>, window_params = [{transform_indices = @transform_0, window_bounds = array<i64: 1, 4, 2, 128>}, {transform_indices = @transform_1, window_bounds = array<i64: 1, 2, 128>}, {transform_indices = @transform_2, window_bounds = array<i64: 1, 1, 128>}]} {
    %c0_i32 = arith.constant 0 : i32
    %0 = arith.cmpi eq, %arg1, %c0_i32 : i32
    %1 = arith.extui %0 : i1 to i32
    %c0_i32_0 = arith.constant 0 : i32
    %2 = arith.cmpi ne, %1, %c0_i32_0 : i32
    scf.if %2 {
      %cst_90 = arith.constant 0.000000e+00 : f32
      %141 = vector.broadcast %cst_90 : f32 to vector<1x1xf32>
      %c0_91 = arith.constant 0 : index
      %c0_92 = arith.constant 0 : index
      %142 = vector.load %arg5[%c0_91, %c0_92] : memref<1x1xf32, #tpu.memory_space<vmem>>, vector<1x1xf32>
      tpu.vector_store %arg5[%c0_91, %c0_92], %141 {strides = array<i32>} : memref<1x1xf32, #tpu.memory_space<vmem>>, vector<1x1xf32>,
      %cst_93 = arith.constant 0.000000e+00 : f32
      %143 = vector.broadcast %cst_93 : f32 to vector<1x1xf32>
      %c0_94 = arith.constant 0 : index
      %c0_95 = arith.constant 0 : index
      %144 = vector.load %arg6[%c0_94, %c0_95] : memref<1x1xf32, #tpu.memory_space<vmem>>, vector<1x1xf32>
      tpu.vector_store %arg6[%c0_94, %c0_95], %143 {strides = array<i32>} : memref<1x1xf32, #tpu.memory_space<vmem>>, vector<1x1xf32>,
      %cst_96 = arith.constant 0.000000e+00 : f32
      %145 = vector.broadcast %cst_96 : f32 to vector<1x1xf32>
      %c0_97 = arith.constant 0 : index
      %c0_98 = arith.constant 0 : index
      %146 = vector.load %arg7[%c0_97, %c0_98] : memref<1x1xf32, #tpu.memory_space<vmem>>, vector<1x1xf32>
      tpu.vector_store %arg7[%c0_97, %c0_98], %145 {strides = array<i32>} : memref<1x1xf32, #tpu.memory_space<vmem>>, vector<1x1xf32>,
      %cst_99 = arith.constant 0.000000e+00 : f32
      %147 = vector.broadcast %cst_99 : f32 to vector<1x1xf32>
      %c0_100 = arith.constant 0 : index
      %c0_101 = arith.constant 0 : index
      %148 = vector.load %arg8[%c0_100, %c0_101] : memref<1x1xf32, #tpu.memory_space<vmem>>, vector<1x1xf32>
      tpu.vector_store %arg8[%c0_100, %c0_101], %147 {strides = array<i32>} : memref<1x1xf32, #tpu.memory_space<vmem>>, vector<1x1xf32>,
      %cst_102 = arith.constant 0.000000e+00 : f32
      %149 = vector.broadcast %cst_102 : f32 to vector<1x1xf32>
      %c0_103 = arith.constant 0 : index
      %c0_104 = arith.constant 0 : index
      %150 = vector.load %arg9[%c0_103, %c0_104] : memref<1x1xf32, #tpu.memory_space<vmem>>, vector<1x1xf32>
      tpu.vector_store %arg9[%c0_103, %c0_104], %149 {strides = array<i32>} : memref<1x1xf32, #tpu.memory_space<vmem>>, vector<1x1xf32>,
      %cst_105 = arith.constant 0.000000e+00 : f32
      %151 = vector.broadcast %cst_105 : f32 to vector<1x1xf32>
      %c0_106 = arith.constant 0 : index
      %c0_107 = arith.constant 0 : index
      %152 = vector.load %arg10[%c0_106, %c0_107] : memref<1x1xf32, #tpu.memory_space<vmem>>, vector<1x1xf32>
      tpu.vector_store %arg10[%c0_106, %c0_107], %151 {strides = array<i32>} : memref<1x1xf32, #tpu.memory_space<vmem>>, vector<1x1xf32>,
      %cst_108 = arith.constant 0.000000e+00 : f32
      %153 = vector.broadcast %cst_108 : f32 to vector<1x1xf32>
      %c0_109 = arith.constant 0 : index
      %c0_110 = arith.constant 0 : index
      %154 = vector.load %arg11[%c0_109, %c0_110] : memref<1x1xf32, #tpu.memory_space<vmem>>, vector<1x1xf32>
      tpu.vector_store %arg11[%c0_109, %c0_110], %153 {strides = array<i32>} : memref<1x1xf32, #tpu.memory_space<vmem>>, vector<1x1xf32>,
      %cst_111 = arith.constant 0.000000e+00 : f32
      %155 = vector.broadcast %cst_111 : f32 to vector<1x1xf32>
      %c0_112 = arith.constant 0 : index
      %c0_113 = arith.constant 0 : index
      %156 = vector.load %arg12[%c0_112, %c0_113] : memref<1x1xf32, #tpu.memory_space<vmem>>, vector<1x1xf32>
      tpu.vector_store %arg12[%c0_112, %c0_113], %155 {strides = array<i32>} : memref<1x1xf32, #tpu.memory_space<vmem>>, vector<1x1xf32>,
      %cst_114 = arith.constant 0.000000e+00 : f32
      %157 = vector.broadcast %cst_114 : f32 to vector<1x1xf32>
      %c0_115 = arith.constant 0 : index
      %c0_116 = arith.constant 0 : index
      %158 = vector.load %arg13[%c0_115, %c0_116] : memref<1x1xf32, #tpu.memory_space<vmem>>, vector<1x1xf32>
      tpu.vector_store %arg13[%c0_115, %c0_116], %157 {strides = array<i32>} : memref<1x1xf32, #tpu.memory_space<vmem>>, vector<1x1xf32>,
      %cst_117 = arith.constant 0.000000e+00 : f32
      %159 = vector.broadcast %cst_117 : f32 to vector<1x1xf32>
      %c0_118 = arith.constant 0 : index
      %c0_119 = arith.constant 0 : index
      %160 = vector.load %arg14[%c0_118, %c0_119] : memref<1x1xf32, #tpu.memory_space<vmem>>, vector<1x1xf32>
      tpu.vector_store %arg14[%c0_118, %c0_119], %159 {strides = array<i32>} : memref<1x1xf32, #tpu.memory_space<vmem>>, vector<1x1xf32>,
      %cst_120 = arith.constant 0.000000e+00 : f32
      %161 = vector.broadcast %cst_120 : f32 to vector<1x1xf32>
      %c0_121 = arith.constant 0 : index
      %c0_122 = arith.constant 0 : index
      %162 = vector.load %arg15[%c0_121, %c0_122] : memref<1x1xf32, #tpu.memory_space<vmem>>, vector<1x1xf32>
      tpu.vector_store %arg15[%c0_121, %c0_122], %161 {strides = array<i32>} : memref<1x1xf32, #tpu.memory_space<vmem>>, vector<1x1xf32>,
      %cst_123 = arith.constant 0.000000e+00 : f32
      %163 = vector.broadcast %cst_123 : f32 to vector<1x1xf32>
      %c0_124 = arith.constant 0 : index
      %c0_125 = arith.constant 0 : index
      %164 = vector.load %arg16[%c0_124, %c0_125] : memref<1x1xf32, #tpu.memory_space<vmem>>, vector<1x1xf32>
      tpu.vector_store %arg16[%c0_124, %c0_125], %163 {strides = array<i32>} : memref<1x1xf32, #tpu.memory_space<vmem>>, vector<1x1xf32>,
    } else {
    }
    %c0 = arith.constant 0 : index
    %c0_1 = arith.constant 0 : index
    %c0_2 = arith.constant 0 : index
    %3 = vector.load %arg3[%c0, %c0_1, %c0_2] : memref<1x2x128xi8, #tpu.memory_space<vmem>>, vector<1x2x128xi8>
    %4 = vector.shape_cast %3 : vector<1x2x128xi8> to vector<2x128xi8>
    %5 = arith.extsi %4 : vector<2x128xi8> to vector<2x128xi32>
    %c0_3 = arith.constant 0 : index
    %c0_4 = arith.constant 0 : index
    %c0_5 = arith.constant 0 : index
    %c0_6 = arith.constant 0 : index
    %6 = vector.load %arg2[%c0_3, %c0_4, %c0_5, %c0_6] : memref<1x4x2x128xf32, #tpu.memory_space<vmem>>, vector<1x1x2x128xf32>
    %7 = vector.shape_cast %6 : vector<1x1x2x128xf32> to vector<2x128xf32>
    %c0_i32_7 = arith.constant 0 : i32
    %8 = vector.broadcast %c0_i32_7 : i32 to vector<2x128xi32>
    %9 = arith.cmpi eq, %5, %8 : vector<2x128xi32>
    %c0_8 = arith.constant 0 : index
    %c0_9 = arith.constant 0 : index
    %10 = vector.load %arg5[%c0_8, %c0_9] : memref<1x1xf32, #tpu.memory_space<vmem>>, vector<1x1xf32>
    %cst = arith.constant 0.000000e+00 : f32
    %11 = vector.broadcast %cst : f32 to vector<2x128xf32>
    %12 = arith.select %9, %7, %11 : vector<2x128xi1>, vector<2x128xf32>
    %13 = vector.shape_cast %12 : vector<2x128xf32> to vector<1x2x128xf32>
    %cst_10 = arith.constant dense<0.000000e+00> : vector<1xf32>
    %14 = vector.multi_reduction <add>, %13, %cst_10 [1, 2] : vector<1x2x128xf32> to vector<1xf32>
    %15 = vector.shape_cast %14 : vector<1xf32> to vector<1x1x1xf32>
    %16 = vector.extract %15[0, 0, 0] : f32 from vector<1x1x1xf32>
    %17 = vector.broadcast %16 : f32 to vector<1x1xf32>
    %18 = arith.addf %10, %17 : vector<1x1xf32>
    %c0_11 = arith.constant 0 : index
    %c0_12 = arith.constant 0 : index
    %19 = vector.load %arg5[%c0_11, %c0_12] : memref<1x1xf32, #tpu.memory_space<vmem>>, vector<1x1xf32>
    tpu.vector_store %arg5[%c0_11, %c0_12], %18 {strides = array<i32>} : memref<1x1xf32, #tpu.memory_space<vmem>>, vector<1x1xf32>,
    %c0_13 = arith.constant 0 : index
    %c0_14 = arith.constant 0 : index
    %20 = vector.load %arg9[%c0_13, %c0_14] : memref<1x1xf32, #tpu.memory_space<vmem>>, vector<1x1xf32>
    %cst_15 = arith.constant 1.000000e+00 : f32
    %cst_16 = arith.constant 0.000000e+00 : f32
    %21 = vector.broadcast %cst_15 : f32 to vector<2x128xf32>
    %22 = vector.broadcast %cst_16 : f32 to vector<2x128xf32>
    %23 = arith.select %9, %21, %22 : vector<2x128xi1>, vector<2x128xf32>
    %24 = vector.shape_cast %23 : vector<2x128xf32> to vector<1x2x128xf32>
    %cst_17 = arith.constant dense<0.000000e+00> : vector<1xf32>
    %25 = vector.multi_reduction <add>, %24, %cst_17 [1, 2] : vector<1x2x128xf32> to vector<1xf32>
    %26 = vector.shape_cast %25 : vector<1xf32> to vector<1x1x1xf32>
    %27 = vector.extract %26[0, 0, 0] : f32 from vector<1x1x1xf32>
    %28 = vector.broadcast %27 : f32 to vector<1x1xf32>
    %29 = arith.addf %20, %28 : vector<1x1xf32>
    %c0_18 = arith.constant 0 : index
    %c0_19 = arith.constant 0 : index
    %30 = vector.load %arg9[%c0_18, %c0_19] : memref<1x1xf32, #tpu.memory_space<vmem>>, vector<1x1xf32>
    tpu.vector_store %arg9[%c0_18, %c0_19], %29 {strides = array<i32>} : memref<1x1xf32, #tpu.memory_space<vmem>>, vector<1x1xf32>,
    %c0_20 = arith.constant 0 : index
    %c0_21 = arith.constant 0 : index
    %31 = vector.load %arg13[%c0_20, %c0_21] : memref<1x1xf32, #tpu.memory_space<vmem>>, vector<1x1xf32>
    %32 = vector.shape_cast %7 : vector<2x128xf32> to vector<1x2x128xf32>
    %cst_22 = arith.constant dense<0.000000e+00> : vector<1xf32>
    %33 = vector.multi_reduction <add>, %32, %cst_22 [1, 2] : vector<1x2x128xf32> to vector<1xf32>
    %34 = vector.shape_cast %33 : vector<1xf32> to vector<1x1x1xf32>
    %35 = vector.extract %34[0, 0, 0] : f32 from vector<1x1x1xf32>
    %36 = vector.broadcast %35 : f32 to vector<1x1xf32>
    %37 = arith.addf %31, %36 : vector<1x1xf32>
    %c0_23 = arith.constant 0 : index
    %c0_24 = arith.constant 0 : index
    %38 = vector.load %arg13[%c0_23, %c0_24] : memref<1x1xf32, #tpu.memory_space<vmem>>, vector<1x1xf32>
    tpu.vector_store %arg13[%c0_23, %c0_24], %37 {strides = array<i32>} : memref<1x1xf32, #tpu.memory_space<vmem>>, vector<1x1xf32>,
    %c0_25 = arith.constant 0 : index
    %c1 = arith.constant 1 : index
    %c0_26 = arith.constant 0 : index
    %c0_27 = arith.constant 0 : index
    %39 = vector.load %arg2[%c0_25, %c1, %c0_26, %c0_27] : memref<1x4x2x128xf32, #tpu.memory_space<vmem>>, vector<1x1x2x128xf32>
    %40 = vector.shape_cast %39 : vector<1x1x2x128xf32> to vector<2x128xf32>
    %c1_i32 = arith.constant 1 : i32
    %41 = vector.broadcast %c1_i32 : i32 to vector<2x128xi32>
    %42 = arith.cmpi eq, %5, %41 : vector<2x128xi32>
    %c0_28 = arith.constant 0 : index
    %c0_29 = arith.constant 0 : index
    %43 = vector.load %arg6[%c0_28, %c0_29] : memref<1x1xf32, #tpu.memory_space<vmem>>, vector<1x1xf32>
    %cst_30 = arith.constant 0.000000e+00 : f32
    %44 = vector.broadcast %cst_30 : f32 to vector<2x128xf32>
    %45 = arith.select %42, %40, %44 : vector<2x128xi1>, vector<2x128xf32>
    %46 = vector.shape_cast %45 : vector<2x128xf32> to vector<1x2x128xf32>
    %cst_31 = arith.constant dense<0.000000e+00> : vector<1xf32>
    %47 = vector.multi_reduction <add>, %46, %cst_31 [1, 2] : vector<1x2x128xf32> to vector<1xf32>
    %48 = vector.shape_cast %47 : vector<1xf32> to vector<1x1x1xf32>
    %49 = vector.extract %48[0, 0, 0] : f32 from vector<1x1x1xf32>
    %50 = vector.broadcast %49 : f32 to vector<1x1xf32>
    %51 = arith.addf %43, %50 : vector<1x1xf32>
    %c0_32 = arith.constant 0 : index
    %c0_33 = arith.constant 0 : index
    %52 = vector.load %arg6[%c0_32, %c0_33] : memref<1x1xf32, #tpu.memory_space<vmem>>, vector<1x1xf32>
    tpu.vector_store %arg6[%c0_32, %c0_33], %51 {strides = array<i32>} : memref<1x1xf32, #tpu.memory_space<vmem>>, vector<1x1xf32>,
    %c0_34 = arith.constant 0 : index
    %c0_35 = arith.constant 0 : index
    %53 = vector.load %arg10[%c0_34, %c0_35] : memref<1x1xf32, #tpu.memory_space<vmem>>, vector<1x1xf32>
    %cst_36 = arith.constant 1.000000e+00 : f32
    %cst_37 = arith.constant 0.000000e+00 : f32
    %54 = vector.broadcast %cst_36 : f32 to vector<2x128xf32>
    %55 = vector.broadcast %cst_37 : f32 to vector<2x128xf32>
    %56 = arith.select %42, %54, %55 : vector<2x128xi1>, vector<2x128xf32>
    %57 = vector.shape_cast %56 : vector<2x128xf32> to vector<1x2x128xf32>
    %cst_38 = arith.constant dense<0.000000e+00> : vector<1xf32>
    %58 = vector.multi_reduction <add>, %57, %cst_38 [1, 2] : vector<1x2x128xf32> to vector<1xf32>
    %59 = vector.shape_cast %58 : vector<1xf32> to vector<1x1x1xf32>
    %60 = vector.extract %59[0, 0, 0] : f32 from vector<1x1x1xf32>
    %61 = vector.broadcast %60 : f32 to vector<1x1xf32>
    %62 = arith.addf %53, %61 : vector<1x1xf32>
    %c0_39 = arith.constant 0 : index
    %c0_40 = arith.constant 0 : index
    %63 = vector.load %arg10[%c0_39, %c0_40] : memref<1x1xf32, #tpu.memory_space<vmem>>, vector<1x1xf32>
    tpu.vector_store %arg10[%c0_39, %c0_40], %62 {strides = array<i32>} : memref<1x1xf32, #tpu.memory_space<vmem>>, vector<1x1xf32>,
    %c0_41 = arith.constant 0 : index
    %c0_42 = arith.constant 0 : index
    %64 = vector.load %arg14[%c0_41, %c0_42] : memref<1x1xf32, #tpu.memory_space<vmem>>, vector<1x1xf32>
    %65 = vector.shape_cast %40 : vector<2x128xf32> to vector<1x2x128xf32>
    %cst_43 = arith.constant dense<0.000000e+00> : vector<1xf32>
    %66 = vector.multi_reduction <add>, %65, %cst_43 [1, 2] : vector<1x2x128xf32> to vector<1xf32>
    %67 = vector.shape_cast %66 : vector<1xf32> to vector<1x1x1xf32>
    %68 = vector.extract %67[0, 0, 0] : f32 from vector<1x1x1xf32>
    %69 = vector.broadcast %68 : f32 to vector<1x1xf32>
    %70 = arith.addf %64, %69 : vector<1x1xf32>
    %c0_44 = arith.constant 0 : index
    %c0_45 = arith.constant 0 : index
    %71 = vector.load %arg14[%c0_44, %c0_45] : memref<1x1xf32, #tpu.memory_space<vmem>>, vector<1x1xf32>
    tpu.vector_store %arg14[%c0_44, %c0_45], %70 {strides = array<i32>} : memref<1x1xf32, #tpu.memory_space<vmem>>, vector<1x1xf32>,
    %c0_46 = arith.constant 0 : index
    %c2 = arith.constant 2 : index
    %c0_47 = arith.constant 0 : index
    %c0_48 = arith.constant 0 : index
    %72 = vector.load %arg2[%c0_46, %c2, %c0_47, %c0_48] : memref<1x4x2x128xf32, #tpu.memory_space<vmem>>, vector<1x1x2x128xf32>
    %73 = vector.shape_cast %72 : vector<1x1x2x128xf32> to vector<2x128xf32>
    %c2_i32 = arith.constant 2 : i32
    %74 = vector.broadcast %c2_i32 : i32 to vector<2x128xi32>
    %75 = arith.cmpi eq, %5, %74 : vector<2x128xi32>
    %c0_49 = arith.constant 0 : index
    %c0_50 = arith.constant 0 : index
    %76 = vector.load %arg7[%c0_49, %c0_50] : memref<1x1xf32, #tpu.memory_space<vmem>>, vector<1x1xf32>
    %cst_51 = arith.constant 0.000000e+00 : f32
    %77 = vector.broadcast %cst_51 : f32 to vector<2x128xf32>
    %78 = arith.select %75, %73, %77 : vector<2x128xi1>, vector<2x128xf32>
    %79 = vector.shape_cast %78 : vector<2x128xf32> to vector<1x2x128xf32>
    %cst_52 = arith.constant dense<0.000000e+00> : vector<1xf32>
    %80 = vector.multi_reduction <add>, %79, %cst_52 [1, 2] : vector<1x2x128xf32> to vector<1xf32>
    %81 = vector.shape_cast %80 : vector<1xf32> to vector<1x1x1xf32>
    %82 = vector.extract %81[0, 0, 0] : f32 from vector<1x1x1xf32>
    %83 = vector.broadcast %82 : f32 to vector<1x1xf32>
    %84 = arith.addf %76, %83 : vector<1x1xf32>
    %c0_53 = arith.constant 0 : index
    %c0_54 = arith.constant 0 : index
    %85 = vector.load %arg7[%c0_53, %c0_54] : memref<1x1xf32, #tpu.memory_space<vmem>>, vector<1x1xf32>
    tpu.vector_store %arg7[%c0_53, %c0_54], %84 {strides = array<i32>} : memref<1x1xf32, #tpu.memory_space<vmem>>, vector<1x1xf32>,
    %c0_55 = arith.constant 0 : index
    %c0_56 = arith.constant 0 : index
    %86 = vector.load %arg11[%c0_55, %c0_56] : memref<1x1xf32, #tpu.memory_space<vmem>>, vector<1x1xf32>
    %cst_57 = arith.constant 1.000000e+00 : f32
    %cst_58 = arith.constant 0.000000e+00 : f32
    %87 = vector.broadcast %cst_57 : f32 to vector<2x128xf32>
    %88 = vector.broadcast %cst_58 : f32 to vector<2x128xf32>
    %89 = arith.select %75, %87, %88 : vector<2x128xi1>, vector<2x128xf32>
    %90 = vector.shape_cast %89 : vector<2x128xf32> to vector<1x2x128xf32>
    %cst_59 = arith.constant dense<0.000000e+00> : vector<1xf32>
    %91 = vector.multi_reduction <add>, %90, %cst_59 [1, 2] : vector<1x2x128xf32> to vector<1xf32>
    %92 = vector.shape_cast %91 : vector<1xf32> to vector<1x1x1xf32>
    %93 = vector.extract %92[0, 0, 0] : f32 from vector<1x1x1xf32>
    %94 = vector.broadcast %93 : f32 to vector<1x1xf32>
    %95 = arith.addf %86, %94 : vector<1x1xf32>
    %c0_60 = arith.constant 0 : index
    %c0_61 = arith.constant 0 : index
    %96 = vector.load %arg11[%c0_60, %c0_61] : memref<1x1xf32, #tpu.memory_space<vmem>>, vector<1x1xf32>
    tpu.vector_store %arg11[%c0_60, %c0_61], %95 {strides = array<i32>} : memref<1x1xf32, #tpu.memory_space<vmem>>, vector<1x1xf32>,
    %c0_62 = arith.constant 0 : index
    %c0_63 = arith.constant 0 : index
    %97 = vector.load %arg15[%c0_62, %c0_63] : memref<1x1xf32, #tpu.memory_space<vmem>>, vector<1x1xf32>
    %98 = vector.shape_cast %73 : vector<2x128xf32> to vector<1x2x128xf32>
    %cst_64 = arith.constant dense<0.000000e+00> : vector<1xf32>
    %99 = vector.multi_reduction <add>, %98, %cst_64 [1, 2] : vector<1x2x128xf32> to vector<1xf32>
    %100 = vector.shape_cast %99 : vector<1xf32> to vector<1x1x1xf32>
    %101 = vector.extract %100[0, 0, 0] : f32 from vector<1x1x1xf32>
    %102 = vector.broadcast %101 : f32 to vector<1x1xf32>
    %103 = arith.addf %97, %102 : vector<1x1xf32>
    %c0_65 = arith.constant 0 : index
    %c0_66 = arith.constant 0 : index
    %104 = vector.load %arg15[%c0_65, %c0_66] : memref<1x1xf32, #tpu.memory_space<vmem>>, vector<1x1xf32>
    tpu.vector_store %arg15[%c0_65, %c0_66], %103 {strides = array<i32>} : memref<1x1xf32, #tpu.memory_space<vmem>>, vector<1x1xf32>,
    %c0_67 = arith.constant 0 : index
    %c3 = arith.constant 3 : index
    %c0_68 = arith.constant 0 : index
    %c0_69 = arith.constant 0 : index
    %105 = vector.load %arg2[%c0_67, %c3, %c0_68, %c0_69] : memref<1x4x2x128xf32, #tpu.memory_space<vmem>>, vector<1x1x2x128xf32>
    %106 = vector.shape_cast %105 : vector<1x1x2x128xf32> to vector<2x128xf32>
    %c3_i32 = arith.constant 3 : i32
    %107 = vector.broadcast %c3_i32 : i32 to vector<2x128xi32>
    %108 = arith.cmpi eq, %5, %107 : vector<2x128xi32>
    %c0_70 = arith.constant 0 : index
    %c0_71 = arith.constant 0 : index
    %109 = vector.load %arg8[%c0_70, %c0_71] : memref<1x1xf32, #tpu.memory_space<vmem>>, vector<1x1xf32>
    %cst_72 = arith.constant 0.000000e+00 : f32
    %110 = vector.broadcast %cst_72 : f32 to vector<2x128xf32>
    %111 = arith.select %108, %106, %110 : vector<2x128xi1>, vector<2x128xf32>
    %112 = vector.shape_cast %111 : vector<2x128xf32> to vector<1x2x128xf32>
    %cst_73 = arith.constant dense<0.000000e+00> : vector<1xf32>
    %113 = vector.multi_reduction <add>, %112, %cst_73 [1, 2] : vector<1x2x128xf32> to vector<1xf32>
    %114 = vector.shape_cast %113 : vector<1xf32> to vector<1x1x1xf32>
    %115 = vector.extract %114[0, 0, 0] : f32 from vector<1x1x1xf32>
    %116 = vector.broadcast %115 : f32 to vector<1x1xf32>
    %117 = arith.addf %109, %116 : vector<1x1xf32>
    %c0_74 = arith.constant 0 : index
    %c0_75 = arith.constant 0 : index
    %118 = vector.load %arg8[%c0_74, %c0_75] : memref<1x1xf32, #tpu.memory_space<vmem>>, vector<1x1xf32>
    tpu.vector_store %arg8[%c0_74, %c0_75], %117 {strides = array<i32>} : memref<1x1xf32, #tpu.memory_space<vmem>>, vector<1x1xf32>,
    %c0_76 = arith.constant 0 : index
    %c0_77 = arith.constant 0 : index
    %119 = vector.load %arg12[%c0_76, %c0_77] : memref<1x1xf32, #tpu.memory_space<vmem>>, vector<1x1xf32>
    %cst_78 = arith.constant 1.000000e+00 : f32
    %cst_79 = arith.constant 0.000000e+00 : f32
    %120 = vector.broadcast %cst_78 : f32 to vector<2x128xf32>
    %121 = vector.broadcast %cst_79 : f32 to vector<2x128xf32>
    %122 = arith.select %108, %120, %121 : vector<2x128xi1>, vector<2x128xf32>
    %123 = vector.shape_cast %122 : vector<2x128xf32> to vector<1x2x128xf32>
    %cst_80 = arith.constant dense<0.000000e+00> : vector<1xf32>
    %124 = vector.multi_reduction <add>, %123, %cst_80 [1, 2] : vector<1x2x128xf32> to vector<1xf32>
    %125 = vector.shape_cast %124 : vector<1xf32> to vector<1x1x1xf32>
    %126 = vector.extract %125[0, 0, 0] : f32 from vector<1x1x1xf32>
    %127 = vector.broadcast %126 : f32 to vector<1x1xf32>
    %128 = arith.addf %119, %127 : vector<1x1xf32>
    %c0_81 = arith.constant 0 : index
    %c0_82 = arith.constant 0 : index
    %129 = vector.load %arg12[%c0_81, %c0_82] : memref<1x1xf32, #tpu.memory_space<vmem>>, vector<1x1xf32>
    tpu.vector_store %arg12[%c0_81, %c0_82], %128 {strides = array<i32>} : memref<1x1xf32, #tpu.memory_space<vmem>>, vector<1x1xf32>,
    %c0_83 = arith.constant 0 : index
    %c0_84 = arith.constant 0 : index
    %130 = vector.load %arg16[%c0_83, %c0_84] : memref<1x1xf32, #tpu.memory_space<vmem>>, vector<1x1xf32>
    %131 = vector.shape_cast %106 : vector<2x128xf32> to vector<1x2x128xf32>
    %cst_85 = arith.constant dense<0.000000e+00> : vector<1xf32>
    %132 = vector.multi_reduction <add>, %131, %cst_85 [1, 2] : vector<1x2x128xf32> to vector<1xf32>
    %133 = vector.shape_cast %132 : vector<1xf32> to vector<1x1x1xf32>
    %134 = vector.extract %133[0, 0, 0] : f32 from vector<1x1x1xf32>
    %135 = vector.broadcast %134 : f32 to vector<1x1xf32>
    %136 = arith.addf %130, %135 : vector<1x1xf32>
    %c0_86 = arith.constant 0 : index
    %c0_87 = arith.constant 0 : index
    %137 = vector.load %arg16[%c0_86, %c0_87] : memref<1x1xf32, #tpu.memory_space<vmem>>, vector<1x1xf32>
    tpu.vector_store %arg16[%c0_86, %c0_87], %136 {strides = array<i32>} : memref<1x1xf32, #tpu.memory_space<vmem>>, vector<1x1xf32>,
    %c0_i32_88 = arith.constant 0 : i32
    %138 = arith.cmpi eq, %arg1, %c0_i32_88 : i32
    %139 = arith.extui %138 : i1 to i32
    %c0_i32_89 = arith.constant 0 : i32
    %140 = arith.cmpi ne, %139, %c0_i32_89 : i32
    scf.if %140 {
      %c0_90 = arith.constant 0 : index
      %c0_91 = arith.constant 0 : index
      %141 = vector.load %arg9[%c0_90, %c0_91] : memref<1x1xf32, #tpu.memory_space<vmem>>, vector<1x1xf32>
      %c0_92 = arith.constant 0 : index
      %c0_93 = arith.constant 0 : index
      %142 = vector.load %arg10[%c0_92, %c0_93] : memref<1x1xf32, #tpu.memory_space<vmem>>, vector<1x1xf32>
      %c0_94 = arith.constant 0 : index
      %c0_95 = arith.constant 0 : index
      %143 = vector.load %arg11[%c0_94, %c0_95] : memref<1x1xf32, #tpu.memory_space<vmem>>, vector<1x1xf32>
      %c0_96 = arith.constant 0 : index
      %c0_97 = arith.constant 0 : index
      %144 = vector.load %arg12[%c0_96, %c0_97] : memref<1x1xf32, #tpu.memory_space<vmem>>, vector<1x1xf32>
      %cst_98 = arith.constant 0.000000e+00 : f32
      %145 = vector.broadcast %cst_98 : f32 to vector<1x1xf32>
      %146 = arith.cmpf oeq, %141, %145 : vector<1x1xf32>
      %cst_99 = arith.constant 1.000000e+00 : f32
      %147 = vector.broadcast %cst_99 : f32 to vector<1x1xf32>
      %148 = arith.select %146, %147, %141 : vector<1x1xi1>, vector<1x1xf32>
      %149 = arith.mulf %148, %148 : vector<1x1xf32>
      %cst_100 = arith.constant 1.000000e+00 : f32
      %150 = vector.broadcast %cst_100 : f32 to vector<1x1xf32>
      %151 = arith.divf %150, %149 : vector<1x1xf32>
      %cst_101 = arith.constant 0.000000e+00 : f32
      %152 = vector.broadcast %cst_101 : f32 to vector<1x1xf32>
      %153 = arith.select %146, %152, %151 : vector<1x1xi1>, vector<1x1xf32>
      %cst_102 = arith.constant 0.000000e+00 : f32
      %154 = vector.broadcast %cst_102 : f32 to vector<1x1xf32>
      %155 = arith.cmpf oeq, %142, %154 : vector<1x1xf32>
      %cst_103 = arith.constant 1.000000e+00 : f32
      %156 = vector.broadcast %cst_103 : f32 to vector<1x1xf32>
      %157 = arith.select %155, %156, %142 : vector<1x1xi1>, vector<1x1xf32>
      %158 = arith.mulf %157, %157 : vector<1x1xf32>
      %cst_104 = arith.constant 1.000000e+00 : f32
      %159 = vector.broadcast %cst_104 : f32 to vector<1x1xf32>
      %160 = arith.divf %159, %158 : vector<1x1xf32>
      %cst_105 = arith.constant 0.000000e+00 : f32
      %161 = vector.broadcast %cst_105 : f32 to vector<1x1xf32>
      %162 = arith.select %155, %161, %160 : vector<1x1xi1>, vector<1x1xf32>
      %cst_106 = arith.constant 0.000000e+00 : f32
      %163 = vector.broadcast %cst_106 : f32 to vector<1x1xf32>
      %164 = arith.cmpf oeq, %143, %163 : vector<1x1xf32>
      %cst_107 = arith.constant 1.000000e+00 : f32
      %165 = vector.broadcast %cst_107 : f32 to vector<1x1xf32>
      %166 = arith.select %164, %165, %143 : vector<1x1xi1>, vector<1x1xf32>
      %167 = arith.mulf %166, %166 : vector<1x1xf32>
      %cst_108 = arith.constant 1.000000e+00 : f32
      %168 = vector.broadcast %cst_108 : f32 to vector<1x1xf32>
      %169 = arith.divf %168, %167 : vector<1x1xf32>
      %cst_109 = arith.constant 0.000000e+00 : f32
      %170 = vector.broadcast %cst_109 : f32 to vector<1x1xf32>
      %171 = arith.select %164, %170, %169 : vector<1x1xi1>, vector<1x1xf32>
      %cst_110 = arith.constant 0.000000e+00 : f32
      %172 = vector.broadcast %cst_110 : f32 to vector<1x1xf32>
      %173 = arith.cmpf oeq, %144, %172 : vector<1x1xf32>
      %cst_111 = arith.constant 1.000000e+00 : f32
      %174 = vector.broadcast %cst_111 : f32 to vector<1x1xf32>
      %175 = arith.select %173, %174, %144 : vector<1x1xi1>, vector<1x1xf32>
      %176 = arith.mulf %175, %175 : vector<1x1xf32>
      %cst_112 = arith.constant 1.000000e+00 : f32
      %177 = vector.broadcast %cst_112 : f32 to vector<1x1xf32>
      %178 = arith.divf %177, %176 : vector<1x1xf32>
      %cst_113 = arith.constant 0.000000e+00 : f32
      %179 = vector.broadcast %cst_113 : f32 to vector<1x1xf32>
      %180 = arith.select %173, %179, %178 : vector<1x1xi1>, vector<1x1xf32>
      %181 = arith.maximumf %153, %162 : vector<1x1xf32>
      %182 = arith.maximumf %181, %171 : vector<1x1xf32>
      %183 = arith.maximumf %182, %180 : vector<1x1xf32>
      %cst_114 = arith.constant 0.000000e+00 : f32
      %184 = vector.broadcast %cst_114 : f32 to vector<1x1xf32>
      %cst_115 = arith.constant 0.000000e+00 : f32
      %185 = vector.broadcast %cst_115 : f32 to vector<1x1xf32>
      %cst_116 = arith.constant 0.000000e+00 : f32
      %186 = vector.broadcast %cst_116 : f32 to vector<1x1xf32>
      %187 = arith.cmpf oeq, %141, %186 : vector<1x1xf32>
      %188 = arith.select %187, %183, %153 : vector<1x1xi1>, vector<1x1xf32>
      %c0_117 = arith.constant 0 : index
      %c0_118 = arith.constant 0 : index
      %189 = vector.load %arg5[%c0_117, %c0_118] : memref<1x1xf32, #tpu.memory_space<vmem>>, vector<1x1xf32>
      %190 = arith.mulf %189, %188 : vector<1x1xf32>
      %191 = arith.addf %184, %190 : vector<1x1xf32>
      %c0_119 = arith.constant 0 : index
      %c0_120 = arith.constant 0 : index
      %192 = vector.load %arg13[%c0_119, %c0_120] : memref<1x1xf32, #tpu.memory_space<vmem>>, vector<1x1xf32>
      %193 = arith.addf %141, %192 : vector<1x1xf32>
      %194 = arith.mulf %193, %188 : vector<1x1xf32>
      %195 = arith.addf %185, %194 : vector<1x1xf32>
      %cst_121 = arith.constant 0.000000e+00 : f32
      %196 = vector.broadcast %cst_121 : f32 to vector<1x1xf32>
      %197 = arith.cmpf oeq, %142, %196 : vector<1x1xf32>
      %198 = arith.select %197, %183, %162 : vector<1x1xi1>, vector<1x1xf32>
      %c0_122 = arith.constant 0 : index
      %c0_123 = arith.constant 0 : index
      %199 = vector.load %arg6[%c0_122, %c0_123] : memref<1x1xf32, #tpu.memory_space<vmem>>, vector<1x1xf32>
      %200 = arith.mulf %199, %198 : vector<1x1xf32>
      %201 = arith.addf %191, %200 : vector<1x1xf32>
      %c0_124 = arith.constant 0 : index
      %c0_125 = arith.constant 0 : index
      %202 = vector.load %arg14[%c0_124, %c0_125] : memref<1x1xf32, #tpu.memory_space<vmem>>, vector<1x1xf32>
      %203 = arith.addf %142, %202 : vector<1x1xf32>
      %204 = arith.mulf %203, %198 : vector<1x1xf32>
      %205 = arith.addf %195, %204 : vector<1x1xf32>
      %cst_126 = arith.constant 0.000000e+00 : f32
      %206 = vector.broadcast %cst_126 : f32 to vector<1x1xf32>
      %207 = arith.cmpf oeq, %143, %206 : vector<1x1xf32>
      %208 = arith.select %207, %183, %171 : vector<1x1xi1>, vector<1x1xf32>
      %c0_127 = arith.constant 0 : index
      %c0_128 = arith.constant 0 : index
      %209 = vector.load %arg7[%c0_127, %c0_128] : memref<1x1xf32, #tpu.memory_space<vmem>>, vector<1x1xf32>
      %210 = arith.mulf %209, %208 : vector<1x1xf32>
      %211 = arith.addf %201, %210 : vector<1x1xf32>
      %c0_129 = arith.constant 0 : index
      %c0_130 = arith.constant 0 : index
      %212 = vector.load %arg15[%c0_129, %c0_130] : memref<1x1xf32, #tpu.memory_space<vmem>>, vector<1x1xf32>
      %213 = arith.addf %143, %212 : vector<1x1xf32>
      %214 = arith.mulf %213, %208 : vector<1x1xf32>
      %215 = arith.addf %205, %214 : vector<1x1xf32>
      %cst_131 = arith.constant 0.000000e+00 : f32
      %216 = vector.broadcast %cst_131 : f32 to vector<1x1xf32>
      %217 = arith.cmpf oeq, %144, %216 : vector<1x1xf32>
      %218 = arith.select %217, %183, %180 : vector<1x1xi1>, vector<1x1xf32>
      %c0_132 = arith.constant 0 : index
      %c0_133 = arith.constant 0 : index
      %219 = vector.load %arg8[%c0_132, %c0_133] : memref<1x1xf32, #tpu.memory_space<vmem>>, vector<1x1xf32>
      %220 = arith.mulf %219, %218 : vector<1x1xf32>
      %221 = arith.addf %211, %220 : vector<1x1xf32>
      %c0_134 = arith.constant 0 : index
      %c0_135 = arith.constant 0 : index
      %222 = vector.load %arg16[%c0_134, %c0_135] : memref<1x1xf32, #tpu.memory_space<vmem>>, vector<1x1xf32>
      %223 = arith.addf %144, %222 : vector<1x1xf32>
      %224 = arith.mulf %223, %218 : vector<1x1xf32>
      %225 = arith.addf %215, %224 : vector<1x1xf32>
      %cst_136 = arith.constant 2.000000e+00 : f32
      %226 = vector.broadcast %cst_136 : f32 to vector<1x1xf32>
      %227 = arith.mulf %226, %221 : vector<1x1xf32>
      %cst_137 = arith.constant 9.99999974E-6 : f32
      %228 = vector.broadcast %cst_137 : f32 to vector<1x1xf32>
      %229 = arith.addf %227, %228 : vector<1x1xf32>
      %cst_138 = arith.constant 9.99999974E-6 : f32
      %230 = vector.broadcast %cst_138 : f32 to vector<1x1xf32>
      %231 = arith.addf %225, %230 : vector<1x1xf32>
      %232 = arith.divf %229, %231 : vector<1x1xf32>
      %cst_139 = arith.constant 1.000000e+00 : f32
      %233 = vector.broadcast %cst_139 : f32 to vector<1x1xf32>
      %234 = arith.subf %233, %232 : vector<1x1xf32>
      %235 = vector.shape_cast %234 : vector<1x1xf32> to vector<1x1x1xf32>
      %236 = vector.shape_cast %235 : vector<1x1x1xf32> to vector<1x1x1xf32>
      %237 = vector.broadcast %236 : vector<1x1x1xf32> to vector<1x1x128xf32>
      %c0_140 = arith.constant 0 : index
      %c0_141 = arith.constant 0 : index
      %c0_142 = arith.constant 0 : index
      %238 = vector.load %arg4[%c0_140, %c0_141, %c0_142] : memref<1x1x128xf32, #tpu.memory_space<vmem>>, vector<1x1x128xf32>
      tpu.vector_store %arg4[%c0_140, %c0_141, %c0_142], %237 {strides = array<i32>} : memref<1x1x128xf32, #tpu.memory_space<vmem>>, vector<1x1x128xf32>,
    } else {
    }
    return
  }
  func.func @transform_0(%arg0: i32, %arg1: i32) -> (i32, i32, i32, i32) {
    %c0_i32 = arith.constant 0 : i32
    %c0_i32_0 = arith.constant 0 : i32
    %c0_i32_1 = arith.constant 0 : i32
    return %arg0, %c0_i32, %arg1, %c0_i32_0 : i32, i32, i32, i32
  }
  func.func @transform_1(%arg0: i32, %arg1: i32) -> (i32, i32, i32) {
    %c0_i32 = arith.constant 0 : i32
    %c0_i32_0 = arith.constant 0 : i32
    return %arg0, %arg1, %c0_i32 : i32, i32, i32
  }
  func.func @transform_2(%arg0: i32, %arg1: i32) -> (i32, i32, i32) {
    %c0_i32 = arith.constant 0 : i32
    %c0_i32_0 = arith.constant 0 : i32
    %c0_i32_1 = arith.constant 0 : i32
    return %arg0, %c0_i32, %c0_i32_0 : i32, i32, i32
  }
}

</mosaic_0001>

<llo_original>
// kernel: tpu_custom_call.1
$region0: #{tpu_custom_call.1}
  #allocation0 [shape = 'u32[]', space=smem, size = 0x4, offset = 0x4, fixed_abs, tag = 'smem constant byte address 0x4 - core index']
  #allocation1 [shape = 'u32[144,128]{1,0:T(1,128)}', space=vmem, size = 0x12000, scoped, tag = 'internal scratch']
  #allocation2 [shape = 'f32[1,1]{1,0:T(1,128)}', space=vmem, size = 0x200, scoped, tag = 'scratch operand']
  #allocation3 [shape = 'f32[1,1]{1,0:T(1,128)}', space=vmem, size = 0x200, scoped, tag = 'scratch operand']
  #allocation4 [shape = 'f32[1,1]{1,0:T(1,128)}', space=vmem, size = 0x200, scoped, tag = 'scratch operand']
  #allocation5 [shape = 'f32[1,1]{1,0:T(1,128)}', space=vmem, size = 0x200, scoped, tag = 'scratch operand']
  #allocation6 [shape = 'f32[1,1]{1,0:T(1,128)}', space=vmem, size = 0x200, scoped, tag = 'scratch operand']
  #allocation7 [shape = 'f32[1,1]{1,0:T(1,128)}', space=vmem, size = 0x200, scoped, tag = 'scratch operand']
  #allocation8 [shape = 'f32[1,1]{1,0:T(1,128)}', space=vmem, size = 0x200, scoped, tag = 'scratch operand']
  #allocation9 [shape = 'f32[1,1]{1,0:T(1,128)}', space=vmem, size = 0x200, scoped, tag = 'scratch operand']
  #allocation10 [shape = 'f32[1,1]{1,0:T(1,128)}', space=vmem, size = 0x200, scoped, tag = 'scratch operand']
  #allocation11 [shape = 'f32[1,1]{1,0:T(1,128)}', space=vmem, size = 0x200, scoped, tag = 'scratch operand']
  #allocation12 [shape = 'f32[1,1]{1,0:T(1,128)}', space=vmem, size = 0x200, scoped, tag = 'scratch operand']
  #allocation13 [shape = 'f32[1,1]{1,0:T(1,128)}', space=vmem, size = 0x200, scoped, tag = 'scratch operand']
  %s0 = inlined_call_operand.hbm [shape: f32[2,4,2,128], index: 0, kind: input, shape index: {}]
  %s1 = inlined_call_operand.hbm [shape: s8[2,2,128], index: 1, kind: input, shape index: {}]
  %s2 = inlined_call_operand.hbm [shape: f32[2,1,128], index: 2, kind: output, shape index: {}]
  %s3 = sld [smem:[#allocation0]]
  $region57: #{tpu_custom_call.1} parent=0
    _
  %s5 = ssub.s32 1, %s3
  %s6 = scalar_select 0, %s5, %s3
  $region1: #{tpu_custom_call.1} parent=0
    #allocation14 [shape = 'u8[8192]{0}', space=vmem, size = 0x2000, scoped, tag = 'input window, operand 0']
    #allocation15 [shape = 's32[2]{0}', space=sflag, size = 0x8, scoped, tag = 'scoped memory for tpu_custom_call.1']
    #allocation16 [shape = 's32[2]{0}', space=sflag, size = 0x8, scoped, tag = 'scoped memory for tpu_custom_call.1']
    #allocation17 [shape = 'u8[1024]{0}', space=vmem, size = 0x400, scoped, tag = 'input window, operand 1']
    #allocation18 [shape = 's32[2]{0}', space=sflag, size = 0x8, scoped, tag = 'scoped memory for tpu_custom_call.1']
    #allocation19 [shape = 'u8[1024]{0}', space=vmem, size = 0x400, scoped, tag = 'output window, operand 0']
    %7 = vsyncpa [#allocation15], 0
    %s8 = scalar_lea.sflag [#allocation15], 1
    %9 = vsyncpa %s8, 0
    %10 = vsyncpa [#allocation18], 0
    %s11 = scalar_lea.sflag [#allocation18], 1
    %12 = vsyncpa %s11, 0
    %13 = vsyncpa [#allocation16], 0
    %s14 = scalar_lea.sflag [#allocation16], 1
    %15 = vsyncpa %s14, 0
    loop: start=0, step=1, limit=4
    $region2: #{tpu_custom_call.1} parent=1 // loop_pre_header
      _
    $region3: #{tpu_custom_call.1} parent=1 // loop_header
      %s17 = sphi 0, %s21
      %p18 = scmp.ge.s32.totalorder %s17, 4
      %s24 = sphi 0, %s36
      %s25 = sphi 0, %s32
      %s26 = sphi 0, %s24
      %s27 = sphi 0, %s25
      %s28 = sphi 0, %s26
      %s29 = sphi 0, %s27
      %s41 = sphi 0, %s43
      %s44 = sphi 0, %s41
      %s45 = sphi 0, %s44
      %s61 = sphi 0, %s45
      %s69 = sphi 0, %s71
      %s72 = sphi 0, %s69
      %s73 = sphi 0, %s72
      %s89 = sphi 0, %s73
      %s95 = sphi 0, %s97
      %s98 = sphi 0, %s95
      %s99 = sphi 0, %s98
      %s115 = sphi 0, %s99
    $region4: #{tpu_custom_call.1} parent=1 // loop_header_branch
      %20 = sbr.rel (%p18) target = $region8
    $region5: #{tpu_custom_call.1} parent=1 // loop_body
      %s22 = ssub.s32 %s17, 1
      %s23 = ssub.s32 %s17, 2
      %s30 = sadd.s32 1, %s25
      %p31 = scmp.ge.s32.totalorder %s30, 1
      %s32 = scalar_select %p31, 0, %s30
      %s33 = sadd.s32 1, %s24
      %s34 = scalar_select %p31, %s33, %s24
      %p35 = scmp.ge.s32.totalorder %s34, 2
      %s36 = scalar_select %p35, 0, %s34
      %s37 = ssub.s32 %s24, %s36
      %s38 = ssub.s32 %s25, %s32
      %s39 = sor.u32 %s37, %s38
      %p40 = scmp.eq.s32.totalorder %s39, 0
      %s42 = sadd.s32 %s41, 1
      %s43 = scalar_select %p40, %s41, %s42
      %p46 = pneg %p40
      %p47 = scmp.eq.s32.totalorder %s17, 1
      %p48 = por %p46, %p47
      %p49 = scmp.ne.s32.totalorder %s41, %s44
      %p50 = scmp.eq.s32.totalorder %s17, 0
      %p51 = por %p49, %p50
      %p52 = scmp.ne.s32.totalorder %s41, %s44
      %p53 = scmp.eq.s32.totalorder %s22, 1
      %p54 = por %p52, %p53
      %p55 = scmp.ne.s32.totalorder %s44, %s45
      %p56 = scmp.eq.s32.totalorder %s22, 0
      %p57 = por %p55, %p56
      %p58 = scmp.ne.s32.totalorder %s44, %s45
      %p59 = scmp.eq.s32.totalorder %s23, 1
      %p60 = por %p58, %p59
      %p62 = scmp.ne.s32.totalorder %s45, %s61
      %p63 = scmp.eq.s32.totalorder %s23, 0
      %p64 = por %p62, %p63
      %s65 = ssub.s32 %s24, %s36
      %s66 = ssub.s32 %s25, %s32
      %s67 = sor.u32 %s65, %s66
      %p68 = scmp.eq.s32.totalorder %s67, 0
      %s70 = sadd.s32 %s69, 1
      %s71 = scalar_select %p68, %s69, %s70
      %p74 = pneg %p68
      %p75 = scmp.eq.s32.totalorder %s17, 1
      %p76 = por %p74, %p75
      %p77 = scmp.ne.s32.totalorder %s69, %s72
      %p78 = scmp.eq.s32.totalorder %s17, 0
      %p79 = por %p77, %p78
      %p80 = scmp.ne.s32.totalorder %s69, %s72
      %p81 = scmp.eq.s32.totalorder %s22, 1
      %p82 = por %p80, %p81
      %p83 = scmp.ne.s32.totalorder %s72, %s73
      %p84 = scmp.eq.s32.totalorder %s22, 0
      %p85 = por %p83, %p84
      %p86 = scmp.ne.s32.totalorder %s72, %s73
      %p87 = scmp.eq.s32.totalorder %s23, 1
      %p88 = por %p86, %p87
      %p90 = scmp.ne.s32.totalorder %s73, %s89
      %p91 = scmp.eq.s32.totalorder %s23, 0
      %p92 = por %p90, %p91
      %s93 = ssub.s32 %s24, %s36
      %p94 = scmp.eq.s32.totalorder %s93, 0
      %s96 = sadd.s32 %s95, 1
      %s97 = scalar_select %p94, %s95, %s96
      %p100 = pneg %p94
      %p101 = scmp.eq.s32.totalorder %s17, 1
      %p102 = por %p100, %p101
      %p103 = scmp.ne.s32.totalorder %s95, %s98
      %p104 = scmp.eq.s32.totalorder %s17, 0
      %p105 = por %p103, %p104
      %p106 = scmp.ne.s32.totalorder %s95, %s98
      %p107 = scmp.eq.s32.totalorder %s22, 1
      %p108 = por %p106, %p107
      %p109 = scmp.ne.s32.totalorder %s98, %s99
      %p110 = scmp.eq.s32.totalorder %s22, 0
      %p111 = por %p109, %p110
      %p112 = scmp.ne.s32.totalorder %s98, %s99
      %p113 = scmp.eq.s32.totalorder %s23, 1
      %p114 = por %p112, %p113
      %p116 = scmp.ne.s32.totalorder %s99, %s115
      %p117 = scmp.eq.s32.totalorder %s23, 0
      %p118 = por %p116, %p117
      %p119 = scmp.le.s32.totalorder 1, %s17
      %p120 = scmp.lt.s32.totalorder %s17, 3
      %p121 = pnand %p119, %p120
      %p122 = pneg %p121
      // Predicated region
      $region9: #{tpu_custom_call.1} parent=5 // pred_check
        _
      $region10: #{tpu_custom_call.1} parent=5 // pred_check_branch
        %124 = sbr.rel (%p121) target = $region12
      $region11: #{tpu_custom_call.1} parent=5 // pred_region
        %s125 = ssub.s32 %s17, 1
      $region12: #{tpu_custom_call.1} parent=5 // pred_fallthru
        _
      %p126 = scmp.lt.s32.totalorder %s17, 2
      // Predicated region
      $region13: #{tpu_custom_call.1} parent=5 // pred_check
        %p127 = pneg %p126
      $region14: #{tpu_custom_call.1} parent=5 // pred_check_branch
        %129 = sbr.rel (%p127) target = $region16
      $region15: #{tpu_custom_call.1} parent=5 // pred_region
        // Predicated region
        $region17: #{tpu_custom_call.1} parent=15 // pred_check
          %p130 = pneg %p51
        $region18: #{tpu_custom_call.1} parent=15 // pred_check_branch
          %132 = sbr.rel (%p130) target = $region20
        $region19: #{tpu_custom_call.1} parent=15 // pred_region
          %s133 = sand.u32 %s41, 1
          %s134 = scalar_lea.sflag [#allocation15], %s133
          %s135 = sand.u32 %s41, 1
          %s136 = smul.addr %s135, 8
          %s137 = scalar_lea.vmem [#allocation14], %s136
          %s139 = ssub.s32 128, 128
          %140 = vsyncadd %s134, %s139
          %s141 = smul.addr %s24, 4
          %s142 = sadd.s32 %s25, %s141
          %s143 = smul.addr %s142, 32
          %s144 = scalar_lea.hbm %s0, %s143
          %s145 = sshll.u32 %s137, 4
          %s146 = int_to_ptr.vmem [resolvable:$true] %s145
          %151 = dma.hbm_to_vmem [thread:$0]  %s144, 128, %s146, %s134, 32, 32, 2
        $region20: #{tpu_custom_call.1} parent=15 // pred_fallthru
          _
        // Predicated region
        $region21: #{tpu_custom_call.1} parent=15 // pred_check
          %p152 = pneg %p79
        $region22: #{tpu_custom_call.1} parent=15 // pred_check_branch
          %154 = sbr.rel (%p152) target = $region24
        $region23: #{tpu_custom_call.1} parent=15 // pred_region
          %s155 = sand.u32 %s69, 1
          %s156 = scalar_lea.sflag [#allocation18], %s155
          %s157 = sand.u32 %s69, 1
          %s158 = scalar_lea.vmem [#allocation17], %s157
          %s160 = ssub.s32 16, 16
          %161 = vsyncadd %s156, %s160
          %s162 = sadd.s32 %s25, %s24
          %s163 = smul.addr %s162, 16
          %s164 = scalar_lea.hbm %s1, %s163
          %s166 = sshll.u32 %s158, 4
          %s167 = int_to_ptr.vmem [resolvable:$true] %s166
          %169 = dma.hbm_to_vmem [thread:$0]  %s164, 16, %s167, %s156
        $region24: #{tpu_custom_call.1} parent=15 // pred_fallthru
          _
      $region16: #{tpu_custom_call.1} parent=5 // pred_fallthru
        _
      %p170 = scmp.le.s32.totalorder 1, %s17
      %p171 = scmp.lt.s32.totalorder %s17, 3
      %p172 = pnand %p170, %p171
      %p173 = pneg %p172
      // Predicated region
      $region25: #{tpu_custom_call.1} parent=5 // pred_check
        _
      $region26: #{tpu_custom_call.1} parent=5 // pred_check_branch
        %175 = sbr.rel (%p172) target = $region28
      $region27: #{tpu_custom_call.1} parent=5 // pred_region
        %s176 = ssub.s32 %s17, 1
        %s177 = sand.u32 %s44, 1
        %s178 = scalar_lea.sflag [#allocation15], %s177
        %s179 = sand.u32 %s44, 1
        %s180 = smul.addr %s179, 8
        %s181 = scalar_lea.vmem [#allocation14], %s180
        // Predicated region
        $region29: #{tpu_custom_call.1} parent=27 // pred_check
          %p182 = pneg %p57
        $region30: #{tpu_custom_call.1} parent=27 // pred_check_branch
          %184 = sbr.rel (%p182) target = $region32
        $region31: #{tpu_custom_call.1} parent=27 // pred_region
          %185 = dma.done %s178, 128
        $region32: #{tpu_custom_call.1} parent=27 // pred_fallthru
          _
        %s186 = sand.u32 %s72, 1
        %s187 = scalar_lea.sflag [#allocation18], %s186
        %s188 = sand.u32 %s72, 1
        %s189 = scalar_lea.vmem [#allocation17], %s188
        // Predicated region
        $region33: #{tpu_custom_call.1} parent=27 // pred_check
          %p190 = pneg %p85
        $region34: #{tpu_custom_call.1} parent=27 // pred_check_branch
          %192 = sbr.rel (%p190) target = $region36
        $region35: #{tpu_custom_call.1} parent=27 // pred_region
          %193 = dma.done %s187, 16
        $region36: #{tpu_custom_call.1} parent=27 // pred_fallthru
          _
        %s194 = sand.u32 %s44, 1
        %s195 = scalar_lea.sflag [#allocation15], %s194
        %s196 = sand.u32 %s44, 1
        %s197 = smul.addr %s196, 8
        %s198 = scalar_lea.vmem [#allocation14], %s197
        %p199 = pneg %p57
        %p200 = pneg %p54
        %s201 = sand.u32 %s72, 1
        %s202 = scalar_lea.sflag [#allocation18], %s201
        %s203 = sand.u32 %s72, 1
        %s204 = scalar_lea.vmem [#allocation17], %s203
        %p205 = pneg %p85
        %p206 = pneg %p82
        %p207 = pneg %p111
        %p208 = pneg %p108
        %s209 = sand.u32 %s98, 1
        %s210 = scalar_lea.sflag [#allocation16], %s209
        %s211 = sand.u32 %s98, 1
        %s212 = scalar_lea.vmem [#allocation19], %s211
        %p213 = scmp.eq.s32.totalorder %s27, 0
        // Predicated region
        $region37: #{tpu_custom_call.1} parent=27 // pred_check
          %p214 = pneg %p213
        $region38: #{tpu_custom_call.1} parent=27 // pred_check_branch
          %216 = sbr.rel (%p214) target = $region40
        $region39: #{tpu_custom_call.1} parent=27 // pred_region
          %vm217 = vcmask 0
          %218 = vst.msk [vmem:[#allocation2] sm:$0x1] %vm217, 0.0
          %219 = vst.msk [vmem:[#allocation3] sm:$0x1] %vm217, 0.0
          %220 = vst.msk [vmem:[#allocation4] sm:$0x1] %vm217, 0.0
          %221 = vst.msk [vmem:[#allocation5] sm:$0x1] %vm217, 0.0
          %222 = vst.msk [vmem:[#allocation6] sm:$0x1] %vm217, 0.0
          %223 = vst.msk [vmem:[#allocation7] sm:$0x1] %vm217, 0.0
          %224 = vst.msk [vmem:[#allocation8] sm:$0x1] %vm217, 0.0
          %225 = vst.msk [vmem:[#allocation9] sm:$0x1] %vm217, 0.0
          %226 = vst.msk [vmem:[#allocation10] sm:$0x1] %vm217, 0.0
          %227 = vst.msk [vmem:[#allocation11] sm:$0x1] %vm217, 0.0
          %228 = vst.msk [vmem:[#allocation12] sm:$0x1] %vm217, 0.0
          %229 = vst.msk [vmem:[#allocation13] sm:$0x1] %vm217, 0.0
        $region40: #{tpu_custom_call.1} parent=27 // pred_fallthru
          _
        %v230 = vld [vmem:[%s189] sm:$0x1]
        %v231 = vunpack.c.0.s8 %v230
        %v232 = vld [vmem:[%s181] sm:$0x3]
        %vm233 = vcmp.eq.s32.totalorder %v231, 0
        %v234 = vld [vmem:[#allocation2] sm:$0x1]
        %v235 = vsel %vm233, %v232, 0.0
        %vm236 = vcmask 1041408
        %v237 = vsel %vm236, %v235, 0.0
        %238 = vadd.xlane.f32.xlu0 %v237
        %v239 = vpop.xlane.xlu0 %238
        %v240 = vrot.slane %v239, 4
        %v241 = vadd.f32 %v239, %v240
        %v242 = vrot.slane %v241, 2
        %v243 = vadd.f32 %v241, %v242
        %v244 = vrot.slane %v243, 1
        %v245 = vadd.f32 %v243, %v244
        %s246 = vtos %v245
        %v247 = vstv %s246
        %v248 = vadd.f32 %v234, %v247
        %vm249 = vcmask 0
        %250 = vst.msk [vmem:[#allocation2] sm:$0x1] %vm249, %v248
        %v251 = vld [vmem:[#allocation6] sm:$0x1]
        %v252 = vsel %vm233, 1.0, 0.0
        %v253 = vsel %vm236, %v252, 0.0
        %254 = vadd.xlane.f32.xlu0 %v253
        %v255 = vpop.xlane.xlu0 %254
        %v256 = vrot.slane %v255, 4
        %v257 = vadd.f32 %v255, %v256
        %v258 = vrot.slane %v257, 2
        %v259 = vadd.f32 %v257, %v258
        %v260 = vrot.slane %v259, 1
        %v261 = vadd.f32 %v259, %v260
        %s262 = vtos %v261
        %v263 = vstv %s262
        %v264 = vadd.f32 %v251, %v263
        %265 = vst.msk [vmem:[#allocation6] sm:$0x1] %vm249, %v264
        %v266 = vld [vmem:[#allocation10] sm:$0x1]
        %v267 = vsel %vm236, %v232, 0.0
        %268 = vadd.xlane.f32.xlu0 %v267
        %v269 = vpop.xlane.xlu0 %268
        %v270 = vrot.slane %v269, 4
        %v271 = vadd.f32 %v269, %v270
        %v272 = vrot.slane %v271, 2
        %v273 = vadd.f32 %v271, %v272
        %v274 = vrot.slane %v273, 1
        %v275 = vadd.f32 %v273, %v274
        %s276 = vtos %v275
        %v277 = vstv %s276
        %v278 = vadd.f32 %v266, %v277
        %279 = vst.msk [vmem:[#allocation10] sm:$0x1] %vm249, %v278
        %s280 = scalar_lea.vmem %s181, 2 [#allocation14]
        %v281 = vld [vmem:[%s280] sm:$0x3]
        %vm282 = vcmp.eq.s32.totalorder %v231, 1
        %v283 = vld [vmem:[#allocation3] sm:$0x1]
        %v284 = vsel %vm282, %v281, 0.0
        %v285 = vsel %vm236, %v284, 0.0
        %286 = vadd.xlane.f32.xlu0 %v285
        %v287 = vpop.xlane.xlu0 %286
        %v288 = vrot.slane %v287, 4
        %v289 = vadd.f32 %v287, %v288
        %v290 = vrot.slane %v289, 2
        %v291 = vadd.f32 %v289, %v290
        %v292 = vrot.slane %v291, 1
        %v293 = vadd.f32 %v291, %v292
        %s294 = vtos %v293
        %v295 = vstv %s294
        %v296 = vadd.f32 %v283, %v295
        %297 = vst.msk [vmem:[#allocation3] sm:$0x1] %vm249, %v296
        %v298 = vld [vmem:[#allocation7] sm:$0x1]
        %v299 = vsel %vm282, 1.0, 0.0
        %v300 = vsel %vm236, %v299, 0.0
        %301 = vadd.xlane.f32.xlu0 %v300
        %v302 = vpop.xlane.xlu0 %301
        %v303 = vrot.slane %v302, 4
        %v304 = vadd.f32 %v302, %v303
        %v305 = vrot.slane %v304, 2
        %v306 = vadd.f32 %v304, %v305
        %v307 = vrot.slane %v306, 1
        %v308 = vadd.f32 %v306, %v307
        %s309 = vtos %v308
        %v310 = vstv %s309
        %v311 = vadd.f32 %v298, %v310
        %312 = vst.msk [vmem:[#allocation7] sm:$0x1] %vm249, %v311
        %v313 = vld [vmem:[#allocation11] sm:$0x1]
        %v314 = vsel %vm236, %v281, 0.0
        %315 = vadd.xlane.f32.xlu0 %v314
        %v316 = vpop.xlane.xlu0 %315
        %v317 = vrot.slane %v316, 4
        %v318 = vadd.f32 %v316, %v317
        %v319 = vrot.slane %v318, 2
        %v320 = vadd.f32 %v318, %v319
        %v321 = vrot.slane %v320, 1
        %v322 = vadd.f32 %v320, %v321
        %s323 = vtos %v322
        %v324 = vstv %s323
        %v325 = vadd.f32 %v313, %v324
        %326 = vst.msk [vmem:[#allocation11] sm:$0x1] %vm249, %v325
        %s327 = scalar_lea.vmem %s181, 4 [#allocation14]
        %v328 = vld [vmem:[%s327] sm:$0x3]
        %vm329 = vcmp.eq.s32.totalorder %v231, 2
        %v330 = vld [vmem:[#allocation4] sm:$0x1]
        %v331 = vsel %vm329, %v328, 0.0
        %v332 = vsel %vm236, %v331, 0.0
        %333 = vadd.xlane.f32.xlu0 %v332
        %v334 = vpop.xlane.xlu0 %333
        %v335 = vrot.slane %v334, 4
        %v336 = vadd.f32 %v334, %v335
        %v337 = vrot.slane %v336, 2
        %v338 = vadd.f32 %v336, %v337
        %v339 = vrot.slane %v338, 1
        %v340 = vadd.f32 %v338, %v339
        %s341 = vtos %v340
        %v342 = vstv %s341
        %v343 = vadd.f32 %v330, %v342
        %344 = vst.msk [vmem:[#allocation4] sm:$0x1] %vm249, %v343
        %v345 = vld [vmem:[#allocation8] sm:$0x1]
        %v346 = vsel %vm329, 1.0, 0.0
        %v347 = vsel %vm236, %v346, 0.0
        %348 = vadd.xlane.f32.xlu0 %v347
        %v349 = vpop.xlane.xlu0 %348
        %v350 = vrot.slane %v349, 4
        %v351 = vadd.f32 %v349, %v350
        %v352 = vrot.slane %v351, 2
        %v353 = vadd.f32 %v351, %v352
        %v354 = vrot.slane %v353, 1
        %v355 = vadd.f32 %v353, %v354
        %s356 = vtos %v355
        %v357 = vstv %s356
        %v358 = vadd.f32 %v345, %v357
        %359 = vst.msk [vmem:[#allocation8] sm:$0x1] %vm249, %v358
        %v360 = vld [vmem:[#allocation12] sm:$0x1]
        %v361 = vsel %vm236, %v328, 0.0
        %362 = vadd.xlane.f32.xlu0 %v361
        %v363 = vpop.xlane.xlu0 %362
        %v364 = vrot.slane %v363, 4
        %v365 = vadd.f32 %v363, %v364
        %v366 = vrot.slane %v365, 2
        %v367 = vadd.f32 %v365, %v366
        %v368 = vrot.slane %v367, 1
        %v369 = vadd.f32 %v367, %v368
        %s370 = vtos %v369
        %v371 = vstv %s370
        %v372 = vadd.f32 %v360, %v371
        %373 = vst.msk [vmem:[#allocation12] sm:$0x1] %vm249, %v372
        %s374 = scalar_lea.vmem %s181, 6 [#allocation14]
        %v375 = vld [vmem:[%s374] sm:$0x3]
        %vm376 = vcmp.eq.s32.totalorder %v231, 3
        %v377 = vld [vmem:[#allocation5] sm:$0x1]
        %v378 = vsel %vm376, %v375, 0.0
        %v379 = vsel %vm236, %v378, 0.0
        %380 = vadd.xlane.f32.xlu0 %v379
        %v381 = vpop.xlane.xlu0 %380
        %v382 = vrot.slane %v381, 4
        %v383 = vadd.f32 %v381, %v382
        %v384 = vrot.slane %v383, 2
        %v385 = vadd.f32 %v383, %v384
        %v386 = vrot.slane %v385, 1
        %v387 = vadd.f32 %v385, %v386
        %s388 = vtos %v387
        %v389 = vstv %s388
        %v390 = vadd.f32 %v377, %v389
        %391 = vst.msk [vmem:[#allocation5] sm:$0x1] %vm249, %v390
        %v392 = vld [vmem:[#allocation9] sm:$0x1]
        %v393 = vsel %vm376, 1.0, 0.0
        %v394 = vsel %vm236, %v393, 0.0
        %395 = vadd.xlane.f32.xlu0 %v394
        %v396 = vpop.xlane.xlu0 %395
        %v397 = vrot.slane %v396, 4
        %v398 = vadd.f32 %v396, %v397
        %v399 = vrot.slane %v398, 2
        %v400 = vadd.f32 %v398, %v399
        %v401 = vrot.slane %v400, 1
        %v402 = vadd.f32 %v400, %v401
        %s403 = vtos %v402
        %v404 = vstv %s403
        %v405 = vadd.f32 %v392, %v404
        %406 = vst.msk [vmem:[#allocation9] sm:$0x1] %vm249, %v405
        %v407 = vld [vmem:[#allocation13] sm:$0x1]
        %v408 = vsel %vm236, %v375, 0.0
        %409 = vadd.xlane.f32.xlu0 %v408
        %v410 = vpop.xlane.xlu0 %409
        %v411 = vrot.slane %v410, 4
        %v412 = vadd.f32 %v410, %v411
        %v413 = vrot.slane %v412, 2
        %v414 = vadd.f32 %v412, %v413
        %v415 = vrot.slane %v414, 1
        %v416 = vadd.f32 %v414, %v415
        %s417 = vtos %v416
        %v418 = vstv %s417
        %v419 = vadd.f32 %v407, %v418
        %420 = vst.msk [vmem:[#allocation13] sm:$0x1] %vm249, %v419
        // Predicated region
        $region41: #{tpu_custom_call.1} parent=27 // pred_check
          %p421 = pneg %p213
        $region42: #{tpu_custom_call.1} parent=27 // pred_check_branch
          %423 = sbr.rel (%p421) target = $region44
        $region43: #{tpu_custom_call.1} parent=27 // pred_region
          %v424 = vld [vmem:[#allocation6] sm:$0x1]
          %v425 = vld [vmem:[#allocation7] sm:$0x1]
          %v426 = vld [vmem:[#allocation8] sm:$0x1]
          %v427 = vld [vmem:[#allocation9] sm:$0x1]
          %vm428 = vcmp.eq.f32.partialorder %v424, 0.0
          %v429 = vsel %vm428, 1.0, %v424
          %v430 = vmul.f32 %v429, %v429
          %v431 = vrcp.pop %v430
          %v432 = vmul.f32 1.0, %v431
          %v433 = vsel %vm428, 0.0, %v432
          %vm434 = vcmp.eq.f32.partialorder %v425, 0.0
          %v435 = vsel %vm434, 1.0, %v425
          %v436 = vmul.f32 %v435, %v435
          %v437 = vrcp.pop %v436
          %v438 = vmul.f32 1.0, %v437
          %v439 = vsel %vm434, 0.0, %v438
          %vm440 = vcmp.eq.f32.partialorder %v426, 0.0
          %v441 = vsel %vm440, 1.0, %v426
          %v442 = vmul.f32 %v441, %v441
          %v443 = vrcp.pop %v442
          %v444 = vmul.f32 1.0, %v443
          %v445 = vsel %vm440, 0.0, %v444
          %vm446 = vcmp.eq.f32.partialorder %v427, 0.0
          %v447 = vsel %vm446, 1.0, %v427
          %v448 = vmul.f32 %v447, %v447
          %v449 = vrcp.pop %v448
          %v450 = vmul.f32 1.0, %v449
          %v451 = vsel %vm446, 0.0, %v450
          %v452 = vmax.f32 %v433, %v439
          %v453 = vmax.f32 %v452, %v445
          %v454 = vmax.f32 %v453, %v451
          %v455 = vsel %vm428, %v454, %v432
          %v456 = vld [vmem:[#allocation2] sm:$0x1]
          %v457 = vmul.f32 %v456, %v455
          %v458 = vadd.f32 %v457, 0.0
          %v459 = vld [vmem:[#allocation10] sm:$0x1]
          %v460 = vadd.f32 %v424, %v459
          %v461 = vmul.f32 %v460, %v455
          %v462 = vadd.f32 %v461, 0.0
          %v463 = vsel %vm434, %v454, %v438
          %v464 = vld [vmem:[#allocation3] sm:$0x1]
          %v465 = vmul.f32 %v464, %v463
          %v466 = vadd.f32 %v458, %v465
          %v467 = vld [vmem:[#allocation11] sm:$0x1]
          %v468 = vadd.f32 %v425, %v467
          %v469 = vmul.f32 %v468, %v463
          %v470 = vadd.f32 %v462, %v469
          %v471 = vsel %vm440, %v454, %v444
          %v472 = vld [vmem:[#allocation4] sm:$0x1]
          %v473 = vmul.f32 %v472, %v471
          %v474 = vadd.f32 %v466, %v473
          %v475 = vld [vmem:[#allocation12] sm:$0x1]
          %v476 = vadd.f32 %v426, %v475
          %v477 = vmul.f32 %v476, %v471
          %v478 = vadd.f32 %v470, %v477
          %v479 = vsel %vm446, %v454, %v450
          %v480 = vld [vmem:[#allocation5] sm:$0x1]
          %v481 = vmul.f32 %v480, %v479
          %v482 = vadd.f32 %v474, %v481
          %v483 = vld [vmem:[#allocation13] sm:$0x1]
          %v484 = vadd.f32 %v427, %v483
          %v485 = vmul.f32 %v484, %v479
          %v486 = vadd.f32 %v478, %v485
          %v487 = vmul.f32 %v482, 2.0
          %v488 = vadd.f32 %v487, 1e-05
          %v489 = vadd.f32 %v486, 1e-05
          %v490 = vrcp.pop %v489
          %v491 = vmul.f32 %v488, %v490
          %v492 = vsub.f32 1.0, %v491
          %494 = vset.pattern.permute.xlu0 0
          %495 = vperm.xlu0 %494, %v492
          %v496 = vpop.permute.xlu0 %495
          %v498 = vlaneseq
          %v499 = vshrl.u32 %v498, 7
          %v500 = vsub.s32 0, %v499
          %v501 = vrot.slane %v496, %v500
          %502 = vst [vmem:[%s212] sm:$0x1] %v501
        $region44: #{tpu_custom_call.1} parent=27 // pred_fallthru
          _
        %s503 = sand.u32 %s98, 1
        %s504 = scalar_lea.sflag [#allocation16], %s503
        %s505 = sand.u32 %s98, 1
        %s506 = scalar_lea.vmem [#allocation19], %s505
        // Predicated region
        $region45: #{tpu_custom_call.1} parent=27 // pred_check
          %p507 = pneg %p108
        $region46: #{tpu_custom_call.1} parent=27 // pred_check_branch
          %509 = sbr.rel (%p507) target = $region48
        $region47: #{tpu_custom_call.1} parent=27 // pred_region
          %s511 = ssub.s32 16, 16
          %512 = vsyncadd %s504, %s511
          %s513 = smul.addr %s26, 16
          %s514 = scalar_lea.hbm %s2, %s513
          %s516 = sshll.u32 %s506, 4
          %s517 = int_to_ptr.vmem [resolvable:$true] %s516
          %519 = dma.vmem_to_hbm [thread:$0]  %s517, 16, %s514, %s504
        $region48: #{tpu_custom_call.1} parent=27 // pred_fallthru
          _
      $region28: #{tpu_custom_call.1} parent=5 // pred_fallthru
        _
      %p520 = scmp.le.s32.totalorder 2, %s17
      // Predicated region
      $region49: #{tpu_custom_call.1} parent=5 // pred_check
        %p521 = pneg %p520
      $region50: #{tpu_custom_call.1} parent=5 // pred_check_branch
        %523 = sbr.rel (%p521) target = $region52
      $region51: #{tpu_custom_call.1} parent=5 // pred_region
        %s524 = ssub.s32 %s17, 2
        // Predicated region
        $region53: #{tpu_custom_call.1} parent=51 // pred_check
          %p525 = pneg %p114
        $region54: #{tpu_custom_call.1} parent=51 // pred_check_branch
          %527 = sbr.rel (%p525) target = $region56
        $region55: #{tpu_custom_call.1} parent=51 // pred_region
          %s528 = sand.u32 %s99, 1
          %s529 = scalar_lea.sflag [#allocation16], %s528
          %s530 = sand.u32 %s99, 1
          %s531 = scalar_lea.vmem [#allocation19], %s530
          %532 = dma.done %s529, 16
        $region56: #{tpu_custom_call.1} parent=51 // pred_fallthru
          _
      $region52: #{tpu_custom_call.1} parent=5 // pred_fallthru
        _
    $region6: #{tpu_custom_call.1} parent=1 // loop_footer
      %s21 = sadd.s32 1, %s17
    $region7: #{tpu_custom_call.1} parent=1 // loop_footer_branch
      %16 = sbr.rel target = $region3
    $region8: #{tpu_custom_call.1} parent=1 // loop_exit
      _
    %533 = vsyncpa [#allocation15], 1
    %s534 = scalar_lea.sflag [#allocation15], 1
    %535 = vsyncpa %s534, 1
    %536 = vsyncpa [#allocation18], 1
    %s537 = scalar_lea.sflag [#allocation18], 1
    %538 = vsyncpa %s537, 1
    %539 = vsyncpa [#allocation16], 1
    %s540 = scalar_lea.sflag [#allocation16], 1
    %541 = vsyncpa %s540, 1

</llo_original>
